<compile_context>
chip_gen: v7x
topology: tpu7x:2x2x1
jax: 0.10.0
libtpu: 0.0.40
codegen_flags: <defaults>
</compile_context>

<pallas_src>
import functools

import jax
import jax.numpy as jnp
from jax import lax
from jax.experimental import pallas as pl
from jax.experimental.pallas import tpu as pltpu


# ----------------------------------------------------------------------------
# Pallas kernel: one batch element x one time tile per grid step (NCL layout).
# ----------------------------------------------------------------------------
def _tcn_block_kernel(*refs, K, dilation, pad, halo, single_tile):
    if single_tile:
        (x_ref, w1_ref, b1_ref, w2_ref, b2_ref, wd_ref, bd_ref, o_ref) = refs
        xprev_ref = None
    else:
        (xprev_ref, x_ref, w1_ref, b1_ref, w2_ref, b2_ref, wd_ref, bd_ref,
         o_ref) = refs

    j = pl.program_id(1)                       # time-tile index
    Cout, TL = o_ref.shape[1], o_ref.shape[2]
    Cin = x_ref.shape[1]
    T1 = pad + TL                              # conv1 span: times [t0-pad, t0+TL)

    x_cur = x_ref[0]                           # (Cin, TL), times [t0, t0+TL)

    # Halo: x over [t0-2*pad, t0) = last `halo` columns of the previous time
    # tile; zeros on the first tile (causal zero padding).  In-register, no
    # HBM pad pass and no persistent scratch.
    if single_tile:
        x_halo = jnp.zeros((Cin, halo), x_cur.dtype)
    else:
        x_halo = jnp.where(j > 0, xprev_ref[0, :, TL - halo:],
                           jnp.zeros((Cin, halo), x_cur.dtype))
    x_ext = jnp.concatenate([x_halo, x_cur], axis=1)      # (Cin, halo+TL), f32

    # ---- conv1 (+ bias + LeakyReLU) over times [t0-pad, t0+TL) ----
    # im2col: fold the K dilated taps into the contraction dim -> one matmul.
    xcol = jnp.concatenate(
        [x_ext[:, k * dilation:k * dilation + T1] for k in range(K)], axis=0)
    y1 = jnp.dot(w1_ref[...], xcol.astype(jnp.bfloat16),
                 preferred_element_type=jnp.float32) + b1_ref[...]
    a1 = jnp.where(y1 >= 0, y1, 0.2 * y1)                 # LeakyReLU(0.2), f32
    # conv2 sees *zero* padding (not leaky(b1)) for times < 0: zero the first
    # `pad` columns on the first time tile only.
    col = lax.broadcasted_iota(jnp.int32, (Cout, T1), 1)
    a1 = jnp.where((col >= pad) | (j > 0), a1, 0.0)
    # dropout1: identity (eval mode)

    # ---- conv2 (+ bias + LeakyReLU) over times [t0, t0+TL) ----
    acol = jnp.concatenate(
        [a1[:, k * dilation:k * dilation + TL] for k in range(K)], axis=0)
    y2 = jnp.dot(w2_ref[...], acol.astype(jnp.bfloat16),
                 preferred_element_type=jnp.float32) + b2_ref[...]
    a2 = jnp.where(y2 >= 0, y2, 0.2 * y2)
    # dropout2: identity (eval mode)

    # ---- downsample residual (1x1 conv) + ReLU, add kept in f32 ----
    res = jnp.dot(wd_ref[...], x_cur.astype(jnp.bfloat16),
                  preferred_element_type=jnp.float32) + bd_ref[...]
    o_ref[0] = jnp.maximum(a2 + res, 0.0).astype(o_ref.dtype)


# ----------------------------------------------------------------------------
# Wrapper: layout of weights only (tiny), no full-tensor HBM passes on x/out.
# ----------------------------------------------------------------------------
def _pick_time_tile(L, halo):
    for cand in (512, 256, 128):
        if L % cand == 0 and cand >= halo:
            return cand
    return L


def tcn_block_pallas(x_ncl, w1_oik, b1, w2_oik, b2, wd_oik, bd,
                     *, kernel_size, dilation, padding, time_tile=None):
    B, Cin, L = x_ncl.shape
    Cout = w1_oik.shape[0]
    K = kernel_size
    # The PyTorch module only type-checks (residual add after [:, :, :-padding])
    # when padding == dilation * (K - 1).
    assert padding == dilation * (K - 1) and padding > 0
    halo = 2 * padding                      # receptive field of conv2∘conv1

    TL = time_tile if time_tile is not None else _pick_time_tile(L, halo)
    assert L % TL == 0
    nL = L // TL
    single_tile = nL == 1
    if not single_tile:
        # tiled path: blocks must be lane-aligned and hold the full halo
        assert TL % 128 == 0 and TL >= halo

    # Weights in im2col layout as bf16 MXU operands; biases stay f32.
    # (O, I, K) -> (O, K*I) so xcol row k*Cin + ci matches weight col k*Cin + ci.
    w1col = jnp.transpose(w1_oik, (0, 2, 1)).reshape(Cout, K * Cin)
    w1col = w1col.astype(jnp.bfloat16)
    w2col = jnp.transpose(w2_oik, (0, 2, 1)).reshape(Cout, K * Cout)
    w2col = w2col.astype(jnp.bfloat16)
    wd2d = wd_oik[:, :, 0].astype(jnp.bfloat16)           # (Cout, Cin)
    b1c = b1.reshape(Cout, 1).astype(jnp.float32)
    b2c = b2.reshape(Cout, 1).astype(jnp.float32)
    bdc = bd.reshape(Cout, 1).astype(jnp.float32)

    kern = functools.partial(_tcn_block_kernel, K=K, dilation=dilation,
                             pad=padding, halo=halo, single_tile=single_tile)

    x_cur_spec = pl.BlockSpec((1, Cin, TL), lambda b, j: (b, 0, j))
    const_specs = [
        pl.BlockSpec((Cout, K * Cin), lambda b, j: (0, 0)),
        pl.BlockSpec((Cout, 1), lambda b, j: (0, 0)),
        pl.BlockSpec((Cout, K * Cout), lambda b, j: (0, 0)),
        pl.BlockSpec((Cout, 1), lambda b, j: (0, 0)),
        pl.BlockSpec((Cout, Cin), lambda b, j: (0, 0)),
        pl.BlockSpec((Cout, 1), lambda b, j: (0, 0)),
    ]
    const_args = (w1col, b1c, w2col, b2c, wd2d, bdc)

    if single_tile:
        in_specs = [x_cur_spec, *const_specs]
        args = (x_ncl, *const_args)
    else:
        # Previous time tile of x supplies the causal halo (zeroed when j == 0).
        x_prev_spec = pl.BlockSpec(
            (1, Cin, TL), lambda b, j: (b, 0, jnp.maximum(j - 1, 0)))
        in_specs = [x_prev_spec, x_cur_spec, *const_specs]
        args = (x_ncl, x_ncl, *const_args)

    return pl.pallas_call(
        kern,
        out_shape=jax.ShapeDtypeStruct((B, Cout, L), jnp.float32),
        grid_spec=pltpu.PrefetchScalarGridSpec(
            num_scalar_prefetch=0,
            grid=(B, nL),
            in_specs=in_specs,
            out_specs=pl.BlockSpec((1, Cout, TL), lambda b, j: (b, 0, j)),
        ),
        compiler_params=pltpu.CompilerParams(
            dimension_semantics=("parallel", "parallel")),
    )(*args)


# ----------------------------------------------------------------------------
# Pure-JAX reference mirroring the PyTorch forward (NCL layout).
# emulate_bf16_inputs=True applies the same bf16-operand / f32-accumulation
# policy as the kernel (for a tight apples-to-apples check).
# ----------------------------------------------------------------------------
def tcn_block_ref(x, w1, b1, w2, b2, wd, bd, *, dilation, padding,
                  emulate_bf16_inputs=False):
    if emulate_bf16_inputs:
        cast = lambda a: a.astype(jnp.bfloat16).astype(jnp.float32)
    else:
        cast = lambda a: a

    def conv1d(x, w, b, dil, pad):
        y = lax.conv_general_dilated(
            x, w, window_strides=(1,), padding=[(pad, pad)],
            rhs_dilation=(dil,), dimension_numbers=('NCH', 'OIH', 'NCH'))
        return y + b[None, :, None]

    h = conv1d(cast(x), cast(w1), b1, dilation, padding)[:, :, :-padding]
    h = jnp.where(h >= 0, h, 0.2 * h)
    h = conv1d(cast(h), cast(w2), b2, dilation, padding)[:, :, :-padding]
    h = jnp.where(h >= 0, h, 0.2 * h)
    res = conv1d(cast(x), cast(wd), bd, 1, 0)
    return jnp.maximum(h + res, 0.0)


def _weight_norm(v, g):
    # PyTorch weight_norm (dim=0 for conv): w = g * v / ||v||, norm over (1,2).
    norm = jnp.sqrt(jnp.sum(v * v, axis=(1, 2), keepdims=True))
    return g * v / norm


if __name__ == "__main__":
    input_dim, output_dim = 8, 16
    kernel_size, dilation = 3, 2
    padding = (kernel_size - 1) * dilation       # = 4, standard TCN causal pad

    key = jax.random.PRNGKey(0)
    ks = jax.random.split(key, 9)

    # Deterministic synthetic parameters (weight_norm stores v and g).
    v1 = jax.random.normal(ks[0], (output_dim, input_dim, kernel_size), jnp.float32) * 0.2
    g1 = 1.0 + 0.1 * jax.random.normal(ks[1], (output_dim, 1, 1), jnp.float32)
    b1 = 0.05 * jax.random.normal(ks[2], (output_dim,), jnp.float32)
    v2 = jax.random.normal(ks[3], (output_dim, output_dim, kernel_size), jnp.float32) * 0.2
    g2 = 1.0 + 0.1 * jax.random.normal(ks[4], (output_dim, 1, 1), jnp.float32)
    b2 = 0.05 * jax.random.normal(ks[5], (output_dim,), jnp.float32)
    wd = jax.random.normal(ks[6], (output_dim, input_dim, 1), jnp.float32) * 0.3
    bd = 0.05 * jax.random.normal(ks[7], (output_dim,), jnp.float32)

    w1 = _weight_norm(v1, g1)
    w2 = _weight_norm(v2, g2)

    def check(B, L, time_tile=None):
        x = jax.random.normal(jax.random.fold_in(ks[8], L),
                              (B, input_dim, L), jnp.float32)
        out = tcn_block_pallas(x, w1, b1, w2, b2, wd, bd,
                               kernel_size=kernel_size, dilation=dilation,
                               padding=padding, time_tile=time_tile)
        out = jax.block_until_ready(out)
        assert out.shape == (B, output_dim, L), out.shape

        # Tight check vs a reference using the kernel's bf16-operand policy.
        ref_bf = tcn_block_ref(x, w1, b1, w2, b2, wd, bd,
                               dilation=dilation, padding=padding,
                               emulate_bf16_inputs=True)
        assert jnp.allclose(out, ref_bf, atol=1e-3, rtol=1e-3), \
            float(jnp.max(jnp.abs(out - ref_bf)))

        # Loose check vs exact f32 module semantics (bounds bf16 quantization).
        ref_f32 = tcn_block_ref(x, w1, b1, w2, b2, wd, bd,
                                dilation=dilation, padding=padding)
        assert jnp.allclose(out, ref_f32, atol=5e-2, rtol=5e-2), \
            float(jnp.max(jnp.abs(out - ref_f32)))

    check(B=2, L=16)                   # single time tile (tiny spec shape)
    check(B=2, L=256, time_tile=128)   # tiled time axis, halo across tiles
    print("KERNEL_OK")
</pallas_src>

<mosaic_0001>
module attributes {stable_mosaic.version = 11 : i64} {
  func.func @_tcn_block_kernel(%arg0: i32, %arg1: i32, %arg2: memref<1x8x16xf32, #tpu.memory_space<vmem>>, %arg3: memref<16x24xbf16, #tpu.memory_space<vmem>>, %arg4: memref<16x1xf32, #tpu.memory_space<vmem>>, %arg5: memref<16x48xbf16, #tpu.memory_space<vmem>>, %arg6: memref<16x1xf32, #tpu.memory_space<vmem>>, %arg7: memref<16x8xbf16, #tpu.memory_space<vmem>>, %arg8: memref<16x1xf32, #tpu.memory_space<vmem>>, %arg9: memref<1x16x16xf32, #tpu.memory_space<vmem>>) attributes {dimension_semantics = [#tpu.dimension_semantics<parallel>, #tpu.dimension_semantics<parallel>], iteration_bounds = array<i64: 2, 1>, scalar_prefetch = 0 : i64, scratch_operands = 0 : i64, tpu.core_type = #tpu.core_type<tc>, window_params = [{transform_indices = @transform_0, window_bounds = array<i64: 1, 8, 16>}, {pipeline_mode = #tpu.pipeline_mode<synchronous>, transform_indices = @transform_1, window_bounds = array<i64: 16, 24>}, {pipeline_mode = #tpu.pipeline_mode<synchronous>, transform_indices = @transform_2, window_bounds = array<i64: 16, 1>}, {pipeline_mode = #tpu.pipeline_mode<synchronous>, transform_indices = @transform_3, window_bounds = array<i64: 16, 48>}, {pipeline_mode = #tpu.pipeline_mode<synchronous>, transform_indices = @transform_4, window_bounds = array<i64: 16, 1>}, {pipeline_mode = #tpu.pipeline_mode<synchronous>, transform_indices = @transform_5, window_bounds = array<i64: 16, 8>}, {pipeline_mode = #tpu.pipeline_mode<synchronous>, transform_indices = @transform_6, window_bounds = array<i64: 16, 1>}, {transform_indices = @transform_7, window_bounds = array<i64: 1, 16, 16>}]} {
    %c0 = arith.constant 0 : index
    %c0_0 = arith.constant 0 : index
    %c0_1 = arith.constant 0 : index
    %0 = vector.load %arg2[%c0, %c0_0, %c0_1] : memref<1x8x16xf32, #tpu.memory_space<vmem>>, vector<1x8x16xf32>
    %1 = vector.shape_cast %0 : vector<1x8x16xf32> to vector<8x16xf32>
    %cst = arith.constant 0.000000e+00 : f32
    %2 = vector.broadcast %cst : f32 to vector<8x8xf32>
    %3 = tpu.concatenate %2, %1 in 1 : vector<8x8xf32>, vector<8x16xf32> -> vector<8x24xf32>
    %4 = vector.extract_strided_slice %3 {offsets = [0, 0], sizes = [8, 20], strides = [1, 1]} : vector<8x24xf32> to vector<8x20xf32>
    %5 = vector.extract_strided_slice %3 {offsets = [0, 2], sizes = [8, 20], strides = [1, 1]} : vector<8x24xf32> to vector<8x20xf32>
    %6 = vector.extract_strided_slice %3 {offsets = [0, 4], sizes = [8, 20], strides = [1, 1]} : vector<8x24xf32> to vector<8x20xf32>
    %7 = tpu.concatenate %4, %5, %6 in 0 : vector<8x20xf32>, vector<8x20xf32>, vector<8x20xf32> -> vector<24x20xf32>
    %c0_2 = arith.constant 0 : index
    %c0_3 = arith.constant 0 : index
    %8 = vector.load %arg3[%c0_2, %c0_3] : memref<16x24xbf16, #tpu.memory_space<vmem>>, vector<16x24xbf16>
    %9 = arith.truncf %7 : vector<24x20xf32> to vector<24x20xbf16>
    %cst_4 = arith.constant dense<0.000000e+00> : vector<16x20xf32>
    %10 = tpu.matmul %8, %9, %cst_4 {dimension_numbers = #tpu.dot_dimension_numbers<[1], [0], [0], [1], [0, 0, 1, 1], [], []>} : vector<16x24xbf16>, vector<24x20xbf16>, vector<16x20xf32> -> vector<16x20xf32>
    %c0_5 = arith.constant 0 : index
    %c0_6 = arith.constant 0 : index
    %11 = vector.load %arg4[%c0_5, %c0_6] : memref<16x1xf32, #tpu.memory_space<vmem>>, vector<16x1xf32>
    %12 = vector.broadcast %11 : vector<16x1xf32> to vector<16x20xf32>
    %13 = arith.addf %10, %12 : vector<16x20xf32>
    %cst_7 = arith.constant 0.000000e+00 : f32
    %14 = vector.broadcast %cst_7 : f32 to vector<16x20xf32>
    %15 = arith.cmpf oge, %13, %14 : vector<16x20xf32>
    %cst_8 = arith.constant 2.000000e-01 : f32
    %16 = vector.broadcast %cst_8 : f32 to vector<16x20xf32>
    %17 = arith.mulf %16, %13 : vector<16x20xf32>
    %18 = arith.select %15, %13, %17 : vector<16x20xi1>, vector<16x20xf32>
    %19 = tpu.iota {dimensions = array<i32: 1>} : vector<16x20xi32>
    %c4_i32 = arith.constant 4 : i32
    %20 = vector.broadcast %c4_i32 : i32 to vector<16x20xi32>
    %21 = arith.cmpi sge, %19, %20 : vector<16x20xi32>
    %c0_i32 = arith.constant 0 : i32
    %22 = arith.cmpi sgt, %arg1, %c0_i32 : i32
    %23 = vector.broadcast %22 : i1 to vector<16x20xi1>
    %24 = arith.ori %21, %23 : vector<16x20xi1>
    %cst_9 = arith.constant 0.000000e+00 : f32
    %25 = vector.broadcast %cst_9 : f32 to vector<16x20xf32>
    %26 = arith.select %24, %18, %25 : vector<16x20xi1>, vector<16x20xf32>
    %27 = vector.extract_strided_slice %26 {offsets = [0, 0], sizes = [16, 16], strides = [1, 1]} : vector<16x20xf32> to vector<16x16xf32>
    %28 = vector.extract_strided_slice %26 {offsets = [0, 2], sizes = [16, 16], strides = [1, 1]} : vector<16x20xf32> to vector<16x16xf32>
    %29 = vector.extract_strided_slice %26 {offsets = [0, 4], sizes = [16, 16], strides = [1, 1]} : vector<16x20xf32> to vector<16x16xf32>
    %30 = tpu.concatenate %27, %28, %29 in 0 : vector<16x16xf32>, vector<16x16xf32>, vector<16x16xf32> -> vector<48x16xf32>
    %c0_10 = arith.constant 0 : index
    %c0_11 = arith.constant 0 : index
    %31 = vector.load %arg5[%c0_10, %c0_11] : memref<16x48xbf16, #tpu.memory_space<vmem>>, vector<16x48xbf16>
    %32 = arith.truncf %30 : vector<48x16xf32> to vector<48x16xbf16>
    %cst_12 = arith.constant dense<0.000000e+00> : vector<16x16xf32>
    %33 = tpu.matmul %31, %32, %cst_12 {dimension_numbers = #tpu.dot_dimension_numbers<[1], [0], [0], [1], [0, 0, 1, 1], [], []>} : vector<16x48xbf16>, vector<48x16xbf16>, vector<16x16xf32> -> vector<16x16xf32>
    %c0_13 = arith.constant 0 : index
    %c0_14 = arith.constant 0 : index
    %34 = vector.load %arg6[%c0_13, %c0_14] : memref<16x1xf32, #tpu.memory_space<vmem>>, vector<16x1xf32>
    %35 = vector.broadcast %34 : vector<16x1xf32> to vector<16x16xf32>
    %36 = arith.addf %33, %35 : vector<16x16xf32>
    %cst_15 = arith.constant 0.000000e+00 : f32
    %37 = vector.broadcast %cst_15 : f32 to vector<16x16xf32>
    %38 = arith.cmpf oge, %36, %37 : vector<16x16xf32>
    %cst_16 = arith.constant 2.000000e-01 : f32
    %39 = vector.broadcast %cst_16 : f32 to vector<16x16xf32>
    %40 = arith.mulf %39, %36 : vector<16x16xf32>
    %41 = arith.select %38, %36, %40 : vector<16x16xi1>, vector<16x16xf32>
    %c0_17 = arith.constant 0 : index
    %c0_18 = arith.constant 0 : index
    %42 = vector.load %arg7[%c0_17, %c0_18] : memref<16x8xbf16, #tpu.memory_space<vmem>>, vector<16x8xbf16>
    %43 = arith.truncf %1 : vector<8x16xf32> to vector<8x16xbf16>
    %cst_19 = arith.constant dense<0.000000e+00> : vector<16x16xf32>
    %44 = tpu.matmul %42, %43, %cst_19 {dimension_numbers = #tpu.dot_dimension_numbers<[1], [0], [0], [1], [0, 0, 1, 1], [], []>} : vector<16x8xbf16>, vector<8x16xbf16>, vector<16x16xf32> -> vector<16x16xf32>
    %c0_20 = arith.constant 0 : index
    %c0_21 = arith.constant 0 : index
    %45 = vector.load %arg8[%c0_20, %c0_21] : memref<16x1xf32, #tpu.memory_space<vmem>>, vector<16x1xf32>
    %46 = vector.broadcast %45 : vector<16x1xf32> to vector<16x16xf32>
    %47 = arith.addf %44, %46 : vector<16x16xf32>
    %48 = arith.addf %41, %47 : vector<16x16xf32>
    %cst_22 = arith.constant 0.000000e+00 : f32
    %49 = vector.broadcast %cst_22 : f32 to vector<16x16xf32>
    %50 = arith.maximumf %48, %49 : vector<16x16xf32>
    %c0_23 = arith.constant 0 : index
    %c0_24 = arith.constant 0 : index
    %c0_25 = arith.constant 0 : index
    %51 = vector.load %arg9[%c0_23, %c0_24, %c0_25] : memref<1x16x16xf32, #tpu.memory_space<vmem>>, vector<1x16x16xf32>
    %52 = vector.shape_cast %51 : vector<1x16x16xf32> to vector<16x16xf32>
    %53 = vector.shape_cast %50 : vector<16x16xf32> to vector<1x16x16xf32>
    tpu.vector_store %arg9[%c0_23, %c0_24, %c0_25], %53 {strides = array<i32>} : memref<1x16x16xf32, #tpu.memory_space<vmem>>, vector<1x16x16xf32>,
    return
  }
  func.func @transform_0(%arg0: i32, %arg1: i32) -> (i32, i32, i32) {
    %c0_i32 = arith.constant 0 : i32
    %c0_i32_0 = arith.constant 0 : i32
    return %arg0, %c0_i32, %arg1 : i32, i32, i32
  }
  func.func @transform_1(%arg0: i32, %arg1: i32) -> (i32, i32) {
    %c0_i32 = arith.constant 0 : i32
    %c0_i32_0 = arith.constant 0 : i32
    %c0_i32_1 = arith.constant 0 : i32
    return %c0_i32, %c0_i32_0 : i32, i32
  }
  func.func @transform_2(%arg0: i32, %arg1: i32) -> (i32, i32) {
    %c0_i32 = arith.constant 0 : i32
    %c0_i32_0 = arith.constant 0 : i32
    %c0_i32_1 = arith.constant 0 : i32
    return %c0_i32, %c0_i32_0 : i32, i32
  }
  func.func @transform_3(%arg0: i32, %arg1: i32) -> (i32, i32) {
    %c0_i32 = arith.constant 0 : i32
    %c0_i32_0 = arith.constant 0 : i32
    %c0_i32_1 = arith.constant 0 : i32
    return %c0_i32, %c0_i32_0 : i32, i32
  }
  func.func @transform_4(%arg0: i32, %arg1: i32) -> (i32, i32) {
    %c0_i32 = arith.constant 0 : i32
    %c0_i32_0 = arith.constant 0 : i32
    %c0_i32_1 = arith.constant 0 : i32
    return %c0_i32, %c0_i32_0 : i32, i32
  }
  func.func @transform_5(%arg0: i32, %arg1: i32) -> (i32, i32) {
    %c0_i32 = arith.constant 0 : i32
    %c0_i32_0 = arith.constant 0 : i32
    %c0_i32_1 = arith.constant 0 : i32
    return %c0_i32, %c0_i32_0 : i32, i32
  }
  func.func @transform_6(%arg0: i32, %arg1: i32) -> (i32, i32) {
    %c0_i32 = arith.constant 0 : i32
    %c0_i32_0 = arith.constant 0 : i32
    %c0_i32_1 = arith.constant 0 : i32
    return %c0_i32, %c0_i32_0 : i32, i32
  }
  func.func @transform_7(%arg0: i32, %arg1: i32) -> (i32, i32, i32) {
    %c0_i32 = arith.constant 0 : i32
    %c0_i32_0 = arith.constant 0 : i32
    return %arg0, %c0_i32, %arg1 : i32, i32, i32
  }
}

</mosaic_0001>

<llo_original>
// kernel: tpu_custom_call.1
$region0: #{tpu_custom_call.1}
  #allocation0 [shape = 'u32[]', space=smem, size = 0x4, offset = 0x4, fixed_abs, tag = 'smem constant byte address 0x4 - core index']
  #allocation1 [shape = 'u32[144,128]{1,0:T(1,128)}', space=vmem, size = 0x12000, scoped, tag = 'internal scratch']
  %s0 = inlined_call_operand.vmem [shape: f32[2,8,16], index: 0, kind: input, shape index: {}]
  %s1 = inlined_call_operand.vmem [shape: bf16[16,24], index: 1, kind: input, shape index: {}]
  %s2 = inlined_call_operand.vmem [shape: f32[16,1], index: 2, kind: input, shape index: {}]
  %s3 = inlined_call_operand.vmem [shape: bf16[16,48], index: 3, kind: input, shape index: {}]
  %s4 = inlined_call_operand.vmem [shape: f32[16,1], index: 4, kind: input, shape index: {}]
  %s5 = inlined_call_operand.vmem [shape: bf16[16,8], index: 5, kind: input, shape index: {}]
  %s6 = inlined_call_operand.vmem [shape: f32[16,1], index: 6, kind: input, shape index: {}]
  %s7 = inlined_call_operand.hbm [shape: f32[2,16,16], index: 7, kind: output, shape index: {}]
  %s8 = sld [smem:[#allocation0]]
  $region61: #{tpu_custom_call.1} parent=0
    _
  %s10 = ssub.s32 1, %s8
  %s11 = scalar_select 0, %s10, %s8
  $region1: #{tpu_custom_call.1} parent=0
    #allocation2 [shape = 'u8[16384]{0}', space=vmem, size = 0x4000, scoped, tag = 'output window, operand 0']
    #allocation3 [shape = 's32[2]{0}', space=sflag, size = 0x8, scoped, tag = 'scoped memory for tpu_custom_call.1']
    %12 = vsyncpa [#allocation3], 0
    %s13 = scalar_lea.sflag [#allocation3], 1
    %14 = vsyncpa %s13, 0
    loop: start=0, step=1, limit=4
    $region2: #{tpu_custom_call.1} parent=1 // loop_pre_header
      _
    $region3: #{tpu_custom_call.1} parent=1 // loop_header
      %s16 = sphi 0, %s20
      %p17 = scmp.ge.s32.totalorder %s16, 4
      %s23 = sphi 0, %s35
      %s24 = sphi 0, %s31
      %s25 = sphi 0, %s23
      %s26 = sphi 0, %s24
      %s27 = sphi 0, %s25
      %s28 = sphi 0, %s26
      %s40 = sphi 0, %s42
      %s43 = sphi 0, %s40
      %s44 = sphi 0, %s43
      %s60 = sphi 0, %s44
      %s64 = sphi 0, %s64
      %s66 = sphi 0, %s64
      %s67 = sphi 0, %s66
      %s81 = sphi 0, %s67
      %s85 = sphi 0, %s85
      %s87 = sphi 0, %s85
      %s88 = sphi 0, %s87
      %s102 = sphi 0, %s88
      %s106 = sphi 0, %s106
      %s108 = sphi 0, %s106
      %s109 = sphi 0, %s108
      %s123 = sphi 0, %s109
      %s127 = sphi 0, %s127
      %s129 = sphi 0, %s127
      %s130 = sphi 0, %s129
      %s144 = sphi 0, %s130
      %s148 = sphi 0, %s148
      %s150 = sphi 0, %s148
      %s151 = sphi 0, %s150
      %s165 = sphi 0, %s151
      %s169 = sphi 0, %s169
      %s171 = sphi 0, %s169
      %s172 = sphi 0, %s171
      %s186 = sphi 0, %s172
      %s194 = sphi 0, %s196
      %s197 = sphi 0, %s194
      %s198 = sphi 0, %s197
      %s214 = sphi 0, %s198
    $region4: #{tpu_custom_call.1} parent=1 // loop_header_branch
      %19 = sbr.rel (%p17) target = $region8
    $region5: #{tpu_custom_call.1} parent=1 // loop_body
      %s21 = ssub.s32 %s16, 1
      %s22 = ssub.s32 %s16, 2
      %s29 = sadd.s32 1, %s24
      %p30 = scmp.ge.s32.totalorder %s29, 1
      %s31 = scalar_select %p30, 0, %s29
      %s32 = sadd.s32 1, %s23
      %s33 = scalar_select %p30, %s32, %s23
      %p34 = scmp.ge.s32.totalorder %s33, 2
      %s35 = scalar_select %p34, 0, %s33
      %s36 = ssub.s32 %s23, %s35
      %s37 = ssub.s32 %s24, %s31
      %s38 = sor.u32 %s36, %s37
      %p39 = scmp.eq.s32.totalorder %s38, 0
      %s41 = sadd.s32 %s40, 1
      %s42 = scalar_select %p39, %s40, %s41
      %p45 = pneg %p39
      %p46 = scmp.eq.s32.totalorder %s16, 1
      %p47 = por %p45, %p46
      %p48 = scmp.ne.s32.totalorder %s40, %s43
      %p49 = scmp.eq.s32.totalorder %s16, 0
      %p50 = por %p48, %p49
      %p51 = scmp.ne.s32.totalorder %s40, %s43
      %p52 = scmp.eq.s32.totalorder %s21, 1
      %p53 = por %p51, %p52
      %p54 = scmp.ne.s32.totalorder %s43, %s44
      %p55 = scmp.eq.s32.totalorder %s21, 0
      %p56 = por %p54, %p55
      %p57 = scmp.ne.s32.totalorder %s43, %s44
      %p58 = scmp.eq.s32.totalorder %s22, 1
      %p59 = por %p57, %p58
      %p61 = scmp.ne.s32.totalorder %s44, %s60
      %p62 = scmp.eq.s32.totalorder %s22, 0
      %p63 = por %p61, %p62
      %s65 = sadd.s32 %s64, 1
      %p68 = scmp.eq.s32.totalorder %s16, 1
      %p69 = scmp.ne.s32.totalorder %s64, %s66
      %p70 = scmp.eq.s32.totalorder %s16, 0
      %p71 = por %p69, %p70
      %p72 = scmp.ne.s32.totalorder %s64, %s66
      %p73 = scmp.eq.s32.totalorder %s21, 1
      %p74 = por %p72, %p73
      %p75 = scmp.ne.s32.totalorder %s66, %s67
      %p76 = scmp.eq.s32.totalorder %s21, 0
      %p77 = por %p75, %p76
      %p78 = scmp.ne.s32.totalorder %s66, %s67
      %p79 = scmp.eq.s32.totalorder %s22, 1
      %p80 = por %p78, %p79
      %p82 = scmp.ne.s32.totalorder %s67, %s81
      %p83 = scmp.eq.s32.totalorder %s22, 0
      %p84 = por %p82, %p83
      %s86 = sadd.s32 %s85, 1
      %p89 = scmp.eq.s32.totalorder %s16, 1
      %p90 = scmp.ne.s32.totalorder %s85, %s87
      %p91 = scmp.eq.s32.totalorder %s16, 0
      %p92 = por %p90, %p91
      %p93 = scmp.ne.s32.totalorder %s85, %s87
      %p94 = scmp.eq.s32.totalorder %s21, 1
      %p95 = por %p93, %p94
      %p96 = scmp.ne.s32.totalorder %s87, %s88
      %p97 = scmp.eq.s32.totalorder %s21, 0
      %p98 = por %p96, %p97
      %p99 = scmp.ne.s32.totalorder %s87, %s88
      %p100 = scmp.eq.s32.totalorder %s22, 1
      %p101 = por %p99, %p100
      %p103 = scmp.ne.s32.totalorder %s88, %s102
      %p104 = scmp.eq.s32.totalorder %s22, 0
      %p105 = por %p103, %p104
      %s107 = sadd.s32 %s106, 1
      %p110 = scmp.eq.s32.totalorder %s16, 1
      %p111 = scmp.ne.s32.totalorder %s106, %s108
      %p112 = scmp.eq.s32.totalorder %s16, 0
      %p113 = por %p111, %p112
      %p114 = scmp.ne.s32.totalorder %s106, %s108
      %p115 = scmp.eq.s32.totalorder %s21, 1
      %p116 = por %p114, %p115
      %p117 = scmp.ne.s32.totalorder %s108, %s109
      %p118 = scmp.eq.s32.totalorder %s21, 0
      %p119 = por %p117, %p118
      %p120 = scmp.ne.s32.totalorder %s108, %s109
      %p121 = scmp.eq.s32.totalorder %s22, 1
      %p122 = por %p120, %p121
      %p124 = scmp.ne.s32.totalorder %s109, %s123
      %p125 = scmp.eq.s32.totalorder %s22, 0
      %p126 = por %p124, %p125
      %s128 = sadd.s32 %s127, 1
      %p131 = scmp.eq.s32.totalorder %s16, 1
      %p132 = scmp.ne.s32.totalorder %s127, %s129
      %p133 = scmp.eq.s32.totalorder %s16, 0
      %p134 = por %p132, %p133
      %p135 = scmp.ne.s32.totalorder %s127, %s129
      %p136 = scmp.eq.s32.totalorder %s21, 1
      %p137 = por %p135, %p136
      %p138 = scmp.ne.s32.totalorder %s129, %s130
      %p139 = scmp.eq.s32.totalorder %s21, 0
      %p140 = por %p138, %p139
      %p141 = scmp.ne.s32.totalorder %s129, %s130
      %p142 = scmp.eq.s32.totalorder %s22, 1
      %p143 = por %p141, %p142
      %p145 = scmp.ne.s32.totalorder %s130, %s144
      %p146 = scmp.eq.s32.totalorder %s22, 0
      %p147 = por %p145, %p146
      %s149 = sadd.s32 %s148, 1
      %p152 = scmp.eq.s32.totalorder %s16, 1
      %p153 = scmp.ne.s32.totalorder %s148, %s150
      %p154 = scmp.eq.s32.totalorder %s16, 0
      %p155 = por %p153, %p154
      %p156 = scmp.ne.s32.totalorder %s148, %s150
      %p157 = scmp.eq.s32.totalorder %s21, 1
      %p158 = por %p156, %p157
      %p159 = scmp.ne.s32.totalorder %s150, %s151
      %p160 = scmp.eq.s32.totalorder %s21, 0
      %p161 = por %p159, %p160
      %p162 = scmp.ne.s32.totalorder %s150, %s151
      %p163 = scmp.eq.s32.totalorder %s22, 1
      %p164 = por %p162, %p163
      %p166 = scmp.ne.s32.totalorder %s151, %s165
      %p167 = scmp.eq.s32.totalorder %s22, 0
      %p168 = por %p166, %p167
      %s170 = sadd.s32 %s169, 1
      %p173 = scmp.eq.s32.totalorder %s16, 1
      %p174 = scmp.ne.s32.totalorder %s169, %s171
      %p175 = scmp.eq.s32.totalorder %s16, 0
      %p176 = por %p174, %p175
      %p177 = scmp.ne.s32.totalorder %s169, %s171
      %p178 = scmp.eq.s32.totalorder %s21, 1
      %p179 = por %p177, %p178
      %p180 = scmp.ne.s32.totalorder %s171, %s172
      %p181 = scmp.eq.s32.totalorder %s21, 0
      %p182 = por %p180, %p181
      %p183 = scmp.ne.s32.totalorder %s171, %s172
      %p184 = scmp.eq.s32.totalorder %s22, 1
      %p185 = por %p183, %p184
      %p187 = scmp.ne.s32.totalorder %s172, %s186
      %p188 = scmp.eq.s32.totalorder %s22, 0
      %p189 = por %p187, %p188
      %s190 = ssub.s32 %s23, %s35
      %s191 = ssub.s32 %s24, %s31
      %s192 = sor.u32 %s190, %s191
      %p193 = scmp.eq.s32.totalorder %s192, 0
      %s195 = sadd.s32 %s194, 1
      %s196 = scalar_select %p193, %s194, %s195
      %p199 = pneg %p193
      %p200 = scmp.eq.s32.totalorder %s16, 1
      %p201 = por %p199, %p200
      %p202 = scmp.ne.s32.totalorder %s194, %s197
      %p203 = scmp.eq.s32.totalorder %s16, 0
      %p204 = por %p202, %p203
      %p205 = scmp.ne.s32.totalorder %s194, %s197
      %p206 = scmp.eq.s32.totalorder %s21, 1
      %p207 = por %p205, %p206
      %p208 = scmp.ne.s32.totalorder %s197, %s198
      %p209 = scmp.eq.s32.totalorder %s21, 0
      %p210 = por %p208, %p209
      %p211 = scmp.ne.s32.totalorder %s197, %s198
      %p212 = scmp.eq.s32.totalorder %s22, 1
      %p213 = por %p211, %p212
      %p215 = scmp.ne.s32.totalorder %s198, %s214
      %p216 = scmp.eq.s32.totalorder %s22, 0
      %p217 = por %p215, %p216
      %p218 = scmp.le.s32.totalorder 1, %s16
      %p219 = scmp.lt.s32.totalorder %s16, 3
      %p220 = pnand %p218, %p219
      %p221 = pneg %p220
      // Predicated region
      $region9: #{tpu_custom_call.1} parent=5 // pred_check
        _
      $region10: #{tpu_custom_call.1} parent=5 // pred_check_branch
        %223 = sbr.rel (%p220) target = $region12
      $region11: #{tpu_custom_call.1} parent=5 // pred_region
        %s224 = ssub.s32 %s16, 1
        // Predicated region
        $region13: #{tpu_custom_call.1} parent=11 // pred_check
          %p225 = pneg %p77
        $region14: #{tpu_custom_call.1} parent=11 // pred_check_branch
          %227 = sbr.rel (%p225) target = $region16
        $region15: #{tpu_custom_call.1} parent=11 // pred_region
          _
        $region16: #{tpu_custom_call.1} parent=11 // pred_fallthru
          _
        // Predicated region
        $region17: #{tpu_custom_call.1} parent=11 // pred_check
          %p228 = pneg %p98
        $region18: #{tpu_custom_call.1} parent=11 // pred_check_branch
          %230 = sbr.rel (%p228) target = $region20
        $region19: #{tpu_custom_call.1} parent=11 // pred_region
          _
        $region20: #{tpu_custom_call.1} parent=11 // pred_fallthru
          _
        // Predicated region
        $region21: #{tpu_custom_call.1} parent=11 // pred_check
          %p231 = pneg %p119
        $region22: #{tpu_custom_call.1} parent=11 // pred_check_branch
          %233 = sbr.rel (%p231) target = $region24
        $region23: #{tpu_custom_call.1} parent=11 // pred_region
          _
        $region24: #{tpu_custom_call.1} parent=11 // pred_fallthru
          _
        // Predicated region
        $region25: #{tpu_custom_call.1} parent=11 // pred_check
          %p234 = pneg %p140
        $region26: #{tpu_custom_call.1} parent=11 // pred_check_branch
          %236 = sbr.rel (%p234) target = $region28
        $region27: #{tpu_custom_call.1} parent=11 // pred_region
          _
        $region28: #{tpu_custom_call.1} parent=11 // pred_fallthru
          _
        // Predicated region
        $region29: #{tpu_custom_call.1} parent=11 // pred_check
          %p237 = pneg %p161
        $region30: #{tpu_custom_call.1} parent=11 // pred_check_branch
          %239 = sbr.rel (%p237) target = $region32
        $region31: #{tpu_custom_call.1} parent=11 // pred_region
          _
        $region32: #{tpu_custom_call.1} parent=11 // pred_fallthru
          _
        // Predicated region
        $region33: #{tpu_custom_call.1} parent=11 // pred_check
          %p240 = pneg %p182
        $region34: #{tpu_custom_call.1} parent=11 // pred_check_branch
          %242 = sbr.rel (%p240) target = $region36
        $region35: #{tpu_custom_call.1} parent=11 // pred_region
          _
        $region36: #{tpu_custom_call.1} parent=11 // pred_fallthru
          _
      $region12: #{tpu_custom_call.1} parent=5 // pred_fallthru
        _
      %p243 = scmp.lt.s32.totalorder %s16, 2
      // Predicated region
      $region37: #{tpu_custom_call.1} parent=5 // pred_check
        %p244 = pneg %p243
      $region38: #{tpu_custom_call.1} parent=5 // pred_check_branch
        %246 = sbr.rel (%p244) target = $region40
      $region39: #{tpu_custom_call.1} parent=5 // pred_region
        // Predicated region
        $region41: #{tpu_custom_call.1} parent=39 // pred_check
          %p247 = pneg %p50
        $region42: #{tpu_custom_call.1} parent=39 // pred_check_branch
          %249 = sbr.rel (%p247) target = $region44
        $region43: #{tpu_custom_call.1} parent=39 // pred_region
          %p250 = scmp.lt.s32.totalorder %s23, 1
          %s251 = scalar_select %p250, %s23, 1
          %p252 = scmp.lt.s32.totalorder %s24, 0
          %s253 = scalar_select %p252, %s24, 0
          %s254 = sadd.s32 %s253, %s251
          %s255 = smul.addr %s254, 8
          %s256 = scalar_lea.vmem %s0, %s255
        $region44: #{tpu_custom_call.1} parent=39 // pred_fallthru
          _
      $region40: #{tpu_custom_call.1} parent=5 // pred_fallthru
        _
      %p257 = scmp.le.s32.totalorder 1, %s16
      %p258 = scmp.lt.s32.totalorder %s16, 3
      %p259 = pnand %p257, %p258
      %p260 = pneg %p259
      // Predicated region
      $region45: #{tpu_custom_call.1} parent=5 // pred_check
        _
      $region46: #{tpu_custom_call.1} parent=5 // pred_check_branch
        %262 = sbr.rel (%p259) target = $region48
      $region47: #{tpu_custom_call.1} parent=5 // pred_region
        %s263 = ssub.s32 %s16, 1
        %p264 = scmp.lt.s32.totalorder %s25, 1
        %s265 = scalar_select %p264, %s25, 1
        %p266 = scmp.lt.s32.totalorder %s26, 0
        %s267 = scalar_select %p266, %s26, 0
        %s268 = sadd.s32 %s267, %s265
        %s269 = smul.addr %s268, 8
        %s270 = scalar_lea.vmem %s0, %s269
        %p271 = pneg %p56
        %p272 = pneg %p53
        %p273 = pneg %p77
        %p274 = pneg %p74
        %p275 = pneg %p98
        %p276 = pneg %p95
        %p277 = pneg %p119
        %p278 = pneg %p116
        %p279 = pneg %p140
        %p280 = pneg %p137
        %p281 = pneg %p161
        %p282 = pneg %p158
        %p283 = pneg %p182
        %p284 = pneg %p179
        %p285 = pneg %p210
        %p286 = pneg %p207
        %s287 = sand.u32 %s197, 1
        %s288 = scalar_lea.sflag [#allocation3], %s287
        %s289 = sand.u32 %s197, 1
        %s290 = smul.addr %s289, 16
        %s291 = scalar_lea.vmem [#allocation2], %s290
        %p292 = scmp.lt.s32.totalorder %s25, 1
        %s293 = scalar_select %p292, %s25, 1
        %p294 = scmp.lt.s32.totalorder %s26, 0
        %s295 = scalar_select %p294, %s26, 0
        %s296 = sadd.s32 %s295, %s293
        %s297 = smul.addr %s296, 8
        %s298 = scalar_lea.vmem %s0, %s297
        %v300 = vld [vmem:[%s298] sm:$0xff]
        %302 = vrot.lane.b32.xlu0 %v300, 8
        %v303 = vpop.permute.xlu0 %302
        %vm305 = vcmask 64512
        %v306 = vsel %vm305, 0.0, %v303
        %308 = vrot.lane.b32.xlu0 %v306, 126
        %v309 = vpop.permute.xlu0 %308
        %311 = vrot.lane.b32.xlu0 %v306, 124
        %v312 = vpop.permute.xlu0 %311
        %v314 = vld [vmem:[%s1] sm:$0xf]
        %v315 = vld [vmem:[%s1 + $0x4] sm:$0xf]
        %v316 = vpack.c.bf16 %v309, %v306
        %v317 = vpack.c.bf16 %v312, %v312
        %v318 = vld [vmem:[%s2] sm:$0xff]
        %v319 = vld [vmem:[%s2 + $0x8] sm:$0xff]
        %321 = vset.pattern.permute.xlu0 0
        %322 = vperm.xlu0 %321, %v318
        %v323 = vpop.permute.xlu0 %322
        %326 = vset.pattern.permute.xlu0 0
        %327 = vperm.xlu0 %326, %v319
        %v328 = vpop.permute.xlu0 %327
        %v332 = vunpack.c.l.b16 %v314
        %v333 = vunpack.c.l.b16 %v315
        %v334 = vpack.c.b16 %v333, %v332
        %vm335 = vcmask 195584
        %v337 = vsel %vm335, %v334, 0
        %vm339 = vcmask 1043456
        %v341 = vsel %vm339, %v317, 0
        %343 = vmatprep.subr.bf16.mxu0 0
        %344 = vmatpush1.bf16.msra.mxu0 %v316
        %345 = vmatprep.subr.bf16.mxu0 0
        %346 = vmatpush1.bf16.msra.mxu0 %v341
        %347 = vmatprep.subr.bf16.mxu0 0
        %348 = vmatpush1.bf16.msra.mxu0 0
        %349 = vmatprep.subr.bf16.mxu0 0
        %350 = vmatpush1.bf16.msra.mxu0 0
        %351 = vmatprep.subr.bf16.mxu0 0
        %352 = vmatpush1.bf16.msra.mxu0 0
        %353 = vmatprep.subr.bf16.mxu0 0
        %354 = vmatpush1.bf16.msra.mxu0 0
        %355 = vmatprep.subr.bf16.mxu0 0
        %356 = vmatpush1.bf16.msra.mxu0 0
        %357 = vmatprep.subr.bf16.mxu0 0
        %358 = vmatpush1.bf16.msra.mxu0 0
        %359 = vmatprep.subr.bf16.mxu0 0
        %360 = vmatpush1.bf16.msra.mxu0 0
        %361 = vmatprep.subr.bf16.mxu0 0
        %362 = vmatpush1.bf16.msra.mxu0 0
        %363 = vmatprep.subr.bf16.mxu0 0
        %364 = vmatpush1.bf16.msra.mxu0 0
        %365 = vmatprep.subr.bf16.mxu0 0
        %366 = vmatpush1.bf16.msra.mxu0 0
        %367 = vmatprep.subr.bf16.mxu0 0
        %368 = vmatpush1.bf16.msra.mxu0 0
        %369 = vmatprep.subr.bf16.mxu0 0
        %370 = vmatpush1.bf16.msra.mxu0 0
        %371 = vmatprep.subr.bf16.mxu0 0
        %372 = vmatpush1.bf16.msra.mxu0 0
        %373 = vmatprep.subr.bf16.mxu0 0
        %374 = vmatpush1.bf16.msra.mxu0 0
        %375 = vmatprep.mubr.bf16.mxu0 0
        %376 = vmatmul.mubr.bf16.gmra.mrb[0].mxu0 %v337
        %v377 = vpop.f32.mrb[0].mxu0
        %v378 = vadd.f32 %v323, %v377
        %v379 = vpop.f32.mrb[0].mxu0
        %v380 = vpop.f32.mrb[0].mxu0
        %v381 = vadd.f32 %v328, %v380
        %v382 = vpop.f32.mrb[0].mxu0
        %383 = vdwg.mxu0
        %vm384 = vcmp.ge.f32.partialorder %v378, 0.0
        %vm385 = vcmp.ge.f32.partialorder %v381, 0.0
        %v386 = vmul.f32 %v378, 0.2
        %v387 = vmul.f32 %v381, 0.2
        %v388 = vsel %vm384, %v378, %v386
        %v389 = vsel %vm385, %v381, %v387
        %v390 = vlaneseq
        %v391 = vand.u32 %v390, 127
        %vm392 = vcmp.ge.s32.totalorder %v391, 4
        %p393 = scmp.gt.s32.totalorder %s26, 0
        %s394 = scalar_select %p393, 1, 0
        %v395 = vstv %s394
        %vm396 = vcmp.eq.s32.totalorder %v395, 1
        %vm397 = vmor %vm392, %vm396
        %v398 = vsel %vm397, %v388, 0.0
        %v399 = vsel %vm397, %v389, 0.0
        %402 = vrot.lane.b32.xlu0 %v398, 126
        %v403 = vpop.permute.xlu0 %402
        %404 = vrot.lane.b32.xlu0 %v399, 126
        %v405 = vpop.permute.xlu0 %404
        %408 = vrot.lane.b32.xlu0 %v398, 124
        %v409 = vpop.permute.xlu0 %408
        %410 = vrot.lane.b32.xlu0 %v399, 124
        %v411 = vpop.permute.xlu0 %410
        %v414 = vld [vmem:[%s3] sm:$0xf]
        %v415 = vld [vmem:[%s3 + $0x4] sm:$0xf]
        %v416 = vpack.c.bf16 %v399, %v398
        %v417 = vpack.c.bf16 %v405, %v403
        %v418 = vpack.c.bf16 %v411, %v409
        %v419 = vld [vmem:[%s4] sm:$0xff]
        %v420 = vld [vmem:[%s4 + $0x8] sm:$0xff]
        %422 = vset.pattern.permute.xlu0 0
        %423 = vperm.xlu0 %422, %v419
        %v424 = vpop.permute.xlu0 %423
        %427 = vset.pattern.permute.xlu0 0
        %428 = vperm.xlu0 %427, %v420
        %v429 = vpop.permute.xlu0 %428
        %v433 = vunpack.c.l.b16 %v414
        %v434 = vunpack.c.l.b16 %v415
        %v435 = vpack.c.b16 %v434, %v433
        %vm436 = vcmask 392192
        %v438 = vsel %vm436, %v435, 0
        %440 = vmatprep.subr.bf16.mxu0 0
        %441 = vmatpush1.bf16.msra.mxu0 %v416
        %442 = vmatprep.subr.bf16.mxu0 0
        %443 = vmatpush1.bf16.msra.mxu0 %v417
        %444 = vmatprep.subr.bf16.mxu0 0
        %445 = vmatpush1.bf16.msra.mxu0 %v418
        %446 = vmatprep.subr.bf16.mxu0 0
        %447 = vmatpush1.bf16.msra.mxu0 0
        %448 = vmatprep.subr.bf16.mxu0 0
        %449 = vmatpush1.bf16.msra.mxu0 0
        %450 = vmatprep.subr.bf16.mxu0 0
        %451 = vmatpush1.bf16.msra.mxu0 0
        %452 = vmatprep.subr.bf16.mxu0 0
        %453 = vmatpush1.bf16.msra.mxu0 0
        %454 = vmatprep.subr.bf16.mxu0 0
        %455 = vmatpush1.bf16.msra.mxu0 0
        %456 = vmatprep.subr.bf16.mxu0 0
        %457 = vmatpush1.bf16.msra.mxu0 0
        %458 = vmatprep.subr.bf16.mxu0 0
        %459 = vmatpush1.bf16.msra.mxu0 0
        %460 = vmatprep.subr.bf16.mxu0 0
        %461 = vmatpush1.bf16.msra.mxu0 0
        %462 = vmatprep.subr.bf16.mxu0 0
        %463 = vmatpush1.bf16.msra.mxu0 0
        %464 = vmatprep.subr.bf16.mxu0 0
        %465 = vmatpush1.bf16.msra.mxu0 0
        %466 = vmatprep.subr.bf16.mxu0 0
        %467 = vmatpush1.bf16.msra.mxu0 0
        %468 = vmatprep.subr.bf16.mxu0 0
        %469 = vmatpush1.bf16.msra.mxu0 0
        %470 = vmatprep.subr.bf16.mxu0 0
        %471 = vmatpush1.bf16.msra.mxu0 0
        %472 = vmatprep.mubr.bf16.mxu0 0
        %473 = vmatmul.mubr.bf16.gmra.mrb[0].mxu0 %v438
        %v474 = vpop.f32.mrb[0].mxu0
        %v475 = vadd.f32 %v424, %v474
        %v476 = vpop.f32.mrb[0].mxu0
        %v477 = vpop.f32.mrb[0].mxu0
        %v478 = vadd.f32 %v429, %v477
        %v479 = vpop.f32.mrb[0].mxu0
        %480 = vdwg.mxu0
        %vm481 = vcmp.ge.f32.partialorder %v475, 0.0
        %vm482 = vcmp.ge.f32.partialorder %v478, 0.0
        %v483 = vmul.f32 %v475, 0.2
        %v484 = vmul.f32 %v478, 0.2
        %v485 = vsel %vm481, %v475, %v483
        %v486 = vsel %vm482, %v478, %v484
        %v487 = vld [vmem:[%s5] sm:$0xf]
        %v488 = vld [vmem:[%s5 + $0x4] sm:$0xf]
        %v489 = vpack.c.bf16 %v300, %v300
        %v490 = vld [vmem:[%s6] sm:$0xff]
        %v491 = vld [vmem:[%s6 + $0x8] sm:$0xff]
        %493 = vset.pattern.permute.xlu0 0
        %494 = vperm.xlu0 %493, %v490
        %v495 = vpop.permute.xlu0 %494
        %498 = vset.pattern.permute.xlu0 0
        %499 = vperm.xlu0 %498, %v491
        %v500 = vpop.permute.xlu0 %499
        %v504 = vunpack.c.l.b16 %v487
        %v505 = vunpack.c.l.b16 %v488
        %v506 = vpack.c.b16 %v505, %v504
        %v508 = vsel %vm305, %v506, 0
        %v511 = vsel %vm339, %v489, 0
        %513 = vmatprep.subr.bf16.mxu0 0
        %514 = vmatpush1.bf16.msra.mxu0 %v511
        %515 = vmatprep.subr.bf16.mxu0 0
        %516 = vmatpush1.bf16.msra.mxu0 0
        %517 = vmatprep.subr.bf16.mxu0 0
        %518 = vmatpush1.bf16.msra.mxu0 0
        %519 = vmatprep.subr.bf16.mxu0 0
        %520 = vmatpush1.bf16.msra.mxu0 0
        %521 = vmatprep.subr.bf16.mxu0 0
        %522 = vmatpush1.bf16.msra.mxu0 0
        %523 = vmatprep.subr.bf16.mxu0 0
        %524 = vmatpush1.bf16.msra.mxu0 0
        %525 = vmatprep.subr.bf16.mxu0 0
        %526 = vmatpush1.bf16.msra.mxu0 0
        %527 = vmatprep.subr.bf16.mxu0 0
        %528 = vmatpush1.bf16.msra.mxu0 0
        %529 = vmatprep.subr.bf16.mxu0 0
        %530 = vmatpush1.bf16.msra.mxu0 0
        %531 = vmatprep.subr.bf16.mxu0 0
        %532 = vmatpush1.bf16.msra.mxu0 0
        %533 = vmatprep.subr.bf16.mxu0 0
        %534 = vmatpush1.bf16.msra.mxu0 0
        %535 = vmatprep.subr.bf16.mxu0 0
        %536 = vmatpush1.bf16.msra.mxu0 0
        %537 = vmatprep.subr.bf16.mxu0 0
        %538 = vmatpush1.bf16.msra.mxu0 0
        %539 = vmatprep.subr.bf16.mxu0 0
        %540 = vmatpush1.bf16.msra.mxu0 0
        %541 = vmatprep.subr.bf16.mxu0 0
        %542 = vmatpush1.bf16.msra.mxu0 0
        %543 = vmatprep.subr.bf16.mxu0 0
        %544 = vmatpush1.bf16.msra.mxu0 0
        %545 = vmatprep.mubr.bf16.mxu0 0
        %546 = vmatmul.mubr.bf16.gmra.mrb[0].mxu0 %v508
        %v547 = vpop.f32.mrb[0].mxu0
        %v548 = vadd.f32 %v495, %v547
        %v549 = vpop.f32.mrb[0].mxu0
        %v550 = vpop.f32.mrb[0].mxu0
        %v551 = vadd.f32 %v500, %v550
        %v552 = vpop.f32.mrb[0].mxu0
        %553 = vdwg.mxu0
        %v554 = vadd.f32 %v485, %v548
        %v555 = vadd.f32 %v486, %v551
        %v556 = vmax.f32 %v554, 0.0
        %v557 = vmax.f32 %v555, 0.0
        %vm558 = vcmask 130048
        %559 = vst.msk [vmem:[%s291] sm:$0xff] %vm558, %v556
        %560 = vst.msk [vmem:[%s291 + $0x8] sm:$0xff] %vm558, %v557
        %s561 = sand.u32 %s197, 1
        %s562 = scalar_lea.sflag [#allocation3], %s561
        %s563 = sand.u32 %s197, 1
        %s564 = smul.addr %s563, 16
        %s565 = scalar_lea.vmem [#allocation2], %s564
        // Predicated region
        $region49: #{tpu_custom_call.1} parent=47 // pred_check
          %p566 = pneg %p207
        $region50: #{tpu_custom_call.1} parent=47 // pred_check_branch
          %568 = sbr.rel (%p566) target = $region52
        $region51: #{tpu_custom_call.1} parent=47 // pred_region
          %s570 = ssub.s32 256, 256
          %571 = vsyncadd %s562, %s570
          %s572 = smul.addr %s25, 2
          %s573 = sadd.s32 %s26, %s572
          %s574 = smul.addr %s573, 128
          %s575 = scalar_lea.hbm %s7, %s574
          %s576 = sshll.u32 %s565, 4
          %s577 = int_to_ptr.vmem [resolvable:$true] %s576
          %582 = dma.vmem_to_hbm [thread:$0]  %s577, 256, %s575, %s562, 128, 128, 8
        $region52: #{tpu_custom_call.1} parent=47 // pred_fallthru
          _
      $region48: #{tpu_custom_call.1} parent=5 // pred_fallthru
        _
      %p583 = scmp.le.s32.totalorder 2, %s16
      // Predicated region
      $region53: #{tpu_custom_call.1} parent=5 // pred_check
        %p584 = pneg %p583
      $region54: #{tpu_custom_call.1} parent=5 // pred_check_branch
        %586 = sbr.rel (%p584) target = $region56
      $region55: #{tpu_custom_call.1} parent=5 // pred_region
        %s587 = ssub.s32 %s16, 2
        // Predicated region
        $region57: #{tpu_custom_call.1} parent=55 // pred_check
          %p588 = pneg %p213
        $region58: #{tpu_custom_call.1} parent=55 // pred_check_branch
          %590 = sbr.rel (%p588) target = $region60
        $region59: #{tpu_custom_call.1} parent=55 // pred_region
          %s591 = sand.u32 %s198, 1
          %s592 = scalar_lea.sflag [#allocation3], %s591
          %s593 = sand.u32 %s198, 1
          %s594 = smul.addr %s593, 16
          %s595 = scalar_lea.vmem [#allocation2], %s594
          %596 = dma.done %s592, 256
        $region60: #{tpu_custom_call.1} parent=55 // pred_fallthru
          _
      $region56: #{tpu_custom_call.1} parent=5 // pred_fallthru
        _
    $region6: #{tpu_custom_call.1} parent=1 // loop_footer
      %s20 = sadd.s32 1, %s16
    $region7: #{tpu_custom_call.1} parent=1 // loop_footer_branch
      %15 = sbr.rel target = $region3
    $region8: #{tpu_custom_call.1} parent=1 // loop_exit
      _
    %597 = vsyncpa [#allocation3], 1
    %s598 = scalar_lea.sflag [#allocation3], 1
    %599 = vsyncpa %s598, 1

</llo_original>
